<compile_context>
chip_gen: v6e
topology: v6e:2x2x1
jax: 0.10.0
libtpu: 0.0.40
codegen_flags: <defaults>
</compile_context>

<pallas_src>
import functools

import jax
import jax.numpy as jnp
from jax import lax
from jax.experimental import pallas as pl
from jax.experimental.pallas import tpu as pltpu


# Contract dim 1 of both operands: x (tm, tk) . W (tn, tk) -> (tm, tn).
_NT = (((1,), (1,)), ((), ()))


def _nt_dot(a, b):
    return lax.dot_general(a, b, _NT, preferred_element_type=jnp.float32)


# ---------------------------------------------------------------------------
# Kernels.  Grid order is (j, i, k): j = output-feature blocks (leading,
# parallel), i = batch blocks, k = reduction blocks (innermost, arbitrary).
# ---------------------------------------------------------------------------
def _noisy_acc_kernel(x_ref, wmu_ref, wsig_ref, bmu_ref, bsig_ref,
                      eps_in_ref, eps_out_ref, o_ref, acc_mu, acc_sig):
    j = pl.program_id(0)
    k = pl.program_id(2)
    tk = x_ref.shape[1]
    tn = o_ref.shape[1]

    @pl.when(k == 0)
    def _():
        acc_mu[...] = jnp.zeros_like(acc_mu)
        acc_sig[...] = jnp.zeros_like(acc_sig)

    x = x_ref[...]                                                  # (tm, tk) bf16
    e_in = eps_in_ref[:, pl.ds(pl.multiple_of(k * tk, tk), tk)]     # resident row
    acc_mu[...] += _nt_dot(x, wmu_ref[...])
    acc_sig[...] += _nt_dot(x * e_in, wsig_ref[...])

    @pl.when(k == pl.num_programs(2) - 1)
    def _():
        n0 = pl.multiple_of(j * tn, tn)
        e_out = eps_out_ref[:, pl.ds(n0, tn)]                       # (1, tn) f32
        b = bmu_ref[:, pl.ds(n0, tn)] + bsig_ref[:, pl.ds(n0, tn)] * e_out
        o_ref[...] = (acc_mu[...] + acc_sig[...] * e_out + b).astype(o_ref.dtype)


def _noisy_k1_kernel(x_ref, wmu_ref, wsig_ref, bmu_ref, bsig_ref,
                     eps_in_ref, eps_out_ref, o_ref):
    """Single-K-step fast path: no accumulator scratch, no scf.if phases."""
    j = pl.program_id(0)
    tn = o_ref.shape[1]
    n0 = pl.multiple_of(j * tn, tn)
    x = x_ref[...]
    e_out = eps_out_ref[:, pl.ds(n0, tn)]
    acc = _nt_dot(x, wmu_ref[...]) + _nt_dot(x * eps_in_ref[...], wsig_ref[...]) * e_out
    b = bmu_ref[:, pl.ds(n0, tn)] + bsig_ref[:, pl.ds(n0, tn)] * e_out
    o_ref[...] = (acc + b).astype(o_ref.dtype)


def _linear_acc_kernel(x_ref, wmu_ref, bmu_ref, o_ref, acc):
    j = pl.program_id(0)
    k = pl.program_id(2)
    tn = o_ref.shape[1]

    @pl.when(k == 0)
    def _():
        acc[...] = jnp.zeros_like(acc)

    acc[...] += _nt_dot(x_ref[...], wmu_ref[...])

    @pl.when(k == pl.num_programs(2) - 1)
    def _():
        n0 = pl.multiple_of(j * tn, tn)
        o_ref[...] = (acc[...] + bmu_ref[:, pl.ds(n0, tn)]).astype(o_ref.dtype)


def _linear_k1_kernel(x_ref, wmu_ref, bmu_ref, o_ref):
    j = pl.program_id(0)
    tn = o_ref.shape[1]
    n0 = pl.multiple_of(j * tn, tn)
    o_ref[...] = (_nt_dot(x_ref[...], wmu_ref[...])
                  + bmu_ref[:, pl.ds(n0, tn)]).astype(o_ref.dtype)


# ---------------------------------------------------------------------------
# Wrapper
# ---------------------------------------------------------------------------
# Tile caps.  Worst-case VMEM at the caps (bf16 streams, double-buffered):
#   x 2*512*1024*2 + 2 weights 2*2*512*1024*2 + out 2*512*512*4
#   + 2 f32 accumulators 512*512*4 ~= 12 MiB  -> fits every generation's
#   scoped default; explicit 32 MiB limit gives headroom and stays within
#   physical VMEM on v5e/v6e (128 MiB) and v7x (64 MiB per TC).
_TM_CAP, _TN_CAP, _TK_CAP = 512, 512, 1024
_VMEM_LIMIT = 32 * 1024 * 1024


def _round_up(x, m):
    return ((x + m - 1) // m) * m


def _pick_tile(dim128, cap):
    """dim128 is a multiple of 128.  Full extent if it fits; else the largest
    power-of-two-of-cap divisor >= 128; else cap (rare pad fallback)."""
    if dim128 <= cap:
        return dim128
    t = cap
    while t >= 128:
        if dim128 % t == 0:
            return t
        t //= 2
    return cap


def _pad2(a, rows, cols):
    r, c = a.shape
    if (r, c) == (rows, cols):
        return a                    # no-op (no HBM copy) for aligned shapes
    return jnp.pad(a, ((0, rows - r), (0, cols - c)))


@functools.partial(jax.jit, static_argnames=("training", "compute_dtype"))
def noisy_linear(x, mu_weight, sigma_weight, mu_bias, sigma_bias,
                 eps_in, eps_out, training=True, compute_dtype=jnp.bfloat16):
    """x: (B, in_f); mu/sigma_weight: (out_f, in_f); biases/eps: 1-D."""
    B, in_f = x.shape
    out_f = mu_weight.shape[0]
    out_dtype = x.dtype

    tm = min(_TM_CAP, _round_up(B, 16))          # 16: bf16 sublane packing
    tn = _pick_tile(_round_up(out_f, 128), _TN_CAP)
    tk = _pick_tile(_round_up(in_f, 128), _TK_CAP)
    M = _round_up(B, tm)
    N = _round_up(_round_up(out_f, 128), tn)
    K = _round_up(_round_up(in_f, 128), tk)
    nj, ni, nk = N // tn, M // tm, K // tk

    # bf16 streams; weights kept in natural (out, in) layout (no transpose).
    # NOTE: keep weights in bf16 outside this function for repeated calls so
    # this cast is a no-op rather than a per-call HBM convert.
    x_p = _pad2(x.astype(compute_dtype), M, K)
    wmu = _pad2(mu_weight.astype(compute_dtype), N, K)
    bmu = _pad2(mu_bias.astype(jnp.float32).reshape(1, out_f), 1, N)

    resident = pl.BlockSpec(memory_space=pltpu.MemorySpace.VMEM)
    cparams = pltpu.CompilerParams(
        dimension_semantics=(("parallel", "parallel", "arbitrary") if nk > 1
                             else ("parallel", "parallel")),
        vmem_limit_bytes=_VMEM_LIMIT)

    if nk > 1:
        grid = (nj, ni, nk)
        x_spec = pl.BlockSpec((tm, tk), lambda j, i, k: (i, k))
        w_spec = pl.BlockSpec((tn, tk), lambda j, i, k: (j, k))
        o_spec = pl.BlockSpec((tm, tn), lambda j, i, k: (i, j))
    else:
        grid = (nj, ni)
        x_spec = pl.BlockSpec((tm, tk), lambda j, i: (i, 0))
        w_spec = pl.BlockSpec((tn, tk), lambda j, i: (j, 0))
        o_spec = pl.BlockSpec((tm, tn), lambda j, i: (i, j))

    if not training:
        kernel = _linear_acc_kernel if nk > 1 else _linear_k1_kernel
        scratch = [pltpu.VMEM((tm, tn), jnp.float32)] if nk > 1 else []
        out = pl.pallas_call(
            kernel,
            out_shape=jax.ShapeDtypeStruct((M, N), out_dtype),
            grid_spec=pltpu.PrefetchScalarGridSpec(
                num_scalar_prefetch=0, grid=grid,
                in_specs=[x_spec, w_spec, resident],
                out_specs=o_spec,
                scratch_shapes=scratch),
            compiler_params=cparams,
        )(x_p, wmu, bmu)
        return out[:B, :out_f]

    wsig = _pad2(sigma_weight.astype(compute_dtype), N, K)
    bsig = _pad2(sigma_bias.astype(jnp.float32).reshape(1, out_f), 1, N)
    e_in = _pad2(eps_in.astype(compute_dtype).reshape(1, in_f), 1, K)
    e_out = _pad2(eps_out.astype(jnp.float32).reshape(1, out_f), 1, N)

    kernel = _noisy_acc_kernel if nk > 1 else _noisy_k1_kernel
    scratch = [pltpu.VMEM((tm, tn), jnp.float32)] * 2 if nk > 1 else []
    out = pl.pallas_call(
        kernel,
        out_shape=jax.ShapeDtypeStruct((M, N), out_dtype),
        grid_spec=pltpu.PrefetchScalarGridSpec(
            num_scalar_prefetch=0, grid=grid,
            in_specs=[x_spec, w_spec, w_spec, resident, resident,
                      resident, resident],
            out_specs=o_spec,
            scratch_shapes=scratch),
        compiler_params=cparams,
    )(x_p, wmu, wsig, bmu, bsig, e_in, e_out)
    return out[:B, :out_f]


# ---------------------------------------------------------------------------
# Reference + noise sampling (pure JAX, f32)
# ---------------------------------------------------------------------------
def get_noise_tensor(key, features, bound):
    """sign(u) * sqrt(|u|) with u ~ Uniform(-bound, bound)."""
    u = jax.random.uniform(key, (features,), jnp.float32, -bound, bound)
    return jnp.sign(u) * jnp.sqrt(jnp.abs(u))


def reference(x, mu_weight, sigma_weight, mu_bias, sigma_bias, eps_in, eps_out,
              training=True):
    if not training:
        return x @ mu_weight.T + mu_bias
    w = mu_weight + sigma_weight * jnp.outer(eps_out, eps_in)
    b = mu_bias + sigma_bias * eps_out
    return x @ w.T + b


def _make_inputs(key, B, in_f, out_f, sigma):
    bound = in_f ** -0.5
    ks = jax.random.split(key, 5)
    x = jax.random.normal(ks[0], (B, in_f), jnp.float32)
    mu_w = jax.random.uniform(ks[1], (out_f, in_f), jnp.float32, -bound, bound)
    mu_b = jax.random.uniform(ks[2], (out_f,), jnp.float32, -bound, bound)
    sig_w = jnp.full((out_f, in_f), sigma * bound, jnp.float32)
    sig_b = jnp.full((out_f,), sigma * bound, jnp.float32)
    e_in = get_noise_tensor(ks[3], in_f, bound)
    e_out = get_noise_tensor(ks[4], out_f, bound)
    return x, mu_w, sig_w, mu_b, sig_b, e_in, e_out


if __name__ == "__main__":
    key = jax.random.PRNGKey(0)
    k_small, k_big = jax.random.split(key)

    # --- small RL-sized layer: exercises the single-K-step fast path ------
    args = _make_inputs(k_small, B=8, in_f=32, out_f=64, sigma=0.5)
    y_tr = noisy_linear(*args, training=True)
    jax.block_until_ready(y_tr)
    y_tr_ref = reference(*args, training=True)
    assert y_tr.shape == (8, 64)
    assert jnp.allclose(y_tr, y_tr_ref, atol=5e-2, rtol=5e-2)   # bf16 streams

    y_ev = noisy_linear(*args, training=False)
    jax.block_until_ready(y_ev)
    y_ev_ref = reference(*args, training=False)
    assert y_ev.shape == (8, 64)
    assert jnp.allclose(y_ev, y_ev_ref, atol=5e-2, rtol=5e-2)

    # --- larger layer: exercises the (j, i, k) accumulating path ----------
    args_b = _make_inputs(k_big, B=64, in_f=2048, out_f=1024, sigma=0.5)
    y_tr_b = noisy_linear(*args_b, training=True)
    jax.block_until_ready(y_tr_b)
    y_tr_b_ref = reference(*args_b, training=True)
    assert y_tr_b.shape == (64, 1024)
    assert jnp.allclose(y_tr_b, y_tr_b_ref, atol=1e-1, rtol=1e-1)

    y_ev_b = noisy_linear(*args_b, training=False)
    jax.block_until_ready(y_ev_b)
    y_ev_b_ref = reference(*args_b, training=False)
    assert jnp.allclose(y_ev_b, y_ev_b_ref, atol=1e-1, rtol=1e-1)

    print("KERNEL_OK")
</pallas_src>

<mosaic_0001>
module attributes {stable_mosaic.version = 11 : i64} {
  func.func @_noisy_k1_kernel(%arg0: i32, %arg1: i32, %arg2: memref<16x128xbf16, #tpu.memory_space<vmem>>, %arg3: memref<128x128xbf16, #tpu.memory_space<vmem>>, %arg4: memref<128x128xbf16, #tpu.memory_space<vmem>>, %arg5: memref<1x128xf32, #tpu.memory_space<vmem>>, %arg6: memref<1x128xf32, #tpu.memory_space<vmem>>, %arg7: memref<1x128xbf16, #tpu.memory_space<vmem>>, %arg8: memref<1x128xf32, #tpu.memory_space<vmem>>, %arg9: memref<16x128xf32, #tpu.memory_space<vmem>>) attributes {dimension_semantics = [#tpu.dimension_semantics<parallel>, #tpu.dimension_semantics<parallel>], iteration_bounds = array<i64: 1, 1>, scalar_prefetch = 0 : i64, scratch_operands = 0 : i64, tpu.core_type = #tpu.core_type<tc>, window_params = [{transform_indices = @transform_0, window_bounds = array<i64: 16, 128>}, {transform_indices = @transform_1, window_bounds = array<i64: 128, 128>}, {transform_indices = @transform_2, window_bounds = array<i64: 128, 128>}, {pipeline_mode = #tpu.pipeline_mode<synchronous>, transform_indices = @transform_3, window_bounds = array<i64: 1, 128>}, {pipeline_mode = #tpu.pipeline_mode<synchronous>, transform_indices = @transform_4, window_bounds = array<i64: 1, 128>}, {pipeline_mode = #tpu.pipeline_mode<synchronous>, transform_indices = @transform_5, window_bounds = array<i64: 1, 128>}, {pipeline_mode = #tpu.pipeline_mode<synchronous>, transform_indices = @transform_6, window_bounds = array<i64: 1, 128>}, {transform_indices = @transform_7, window_bounds = array<i64: 16, 128>}]} {
    %c128_i32 = arith.constant 128 : i32
    %0 = arith.muli %arg0, %c128_i32 : i32
    %1 = tpu.assume_multiple %0, 128 : i32
    %c0 = arith.constant 0 : index
    %c0_0 = arith.constant 0 : index
    %2 = vector.load %arg2[%c0, %c0_0] : memref<16x128xbf16, #tpu.memory_space<vmem>>, vector<16x128xbf16>
    %c0_1 = arith.constant 0 : index
    %3 = arith.index_cast %1 : i32 to index
    %4 = vector.load %arg8[%c0_1, %3] : memref<1x128xf32, #tpu.memory_space<vmem>>, vector<1x128xf32>
    %c0_2 = arith.constant 0 : index
    %c0_3 = arith.constant 0 : index
    %5 = vector.load %arg3[%c0_2, %c0_3] : memref<128x128xbf16, #tpu.memory_space<vmem>>, vector<128x128xbf16>
    %cst = arith.constant dense<0.000000e+00> : vector<16x128xf32>
    %6 = tpu.matmul %2, %5, %cst {dimension_numbers = #tpu.dot_dimension_numbers<[1], [1], [0], [0], [0, 0, 1, 0], [], []>} : vector<16x128xbf16>, vector<128x128xbf16>, vector<16x128xf32> -> vector<16x128xf32>
    %c0_4 = arith.constant 0 : index
    %c0_5 = arith.constant 0 : index
    %7 = vector.load %arg7[%c0_4, %c0_5] : memref<1x128xbf16, #tpu.memory_space<vmem>>, vector<1x128xbf16>
    %8 = vector.broadcast %7 : vector<1x128xbf16> to vector<16x128xbf16>
    %9 = arith.mulf %2, %8 : vector<16x128xbf16>
    %c0_6 = arith.constant 0 : index
    %c0_7 = arith.constant 0 : index
    %10 = vector.load %arg4[%c0_6, %c0_7] : memref<128x128xbf16, #tpu.memory_space<vmem>>, vector<128x128xbf16>
    %cst_8 = arith.constant dense<0.000000e+00> : vector<16x128xf32>
    %11 = tpu.matmul %9, %10, %cst_8 {dimension_numbers = #tpu.dot_dimension_numbers<[1], [1], [0], [0], [0, 0, 1, 0], [], []>} : vector<16x128xbf16>, vector<128x128xbf16>, vector<16x128xf32> -> vector<16x128xf32>
    %12 = vector.broadcast %4 : vector<1x128xf32> to vector<16x128xf32>
    %13 = arith.mulf %11, %12 : vector<16x128xf32>
    %14 = arith.addf %6, %13 : vector<16x128xf32>
    %c0_9 = arith.constant 0 : index
    %15 = arith.index_cast %1 : i32 to index
    %16 = vector.load %arg5[%c0_9, %15] : memref<1x128xf32, #tpu.memory_space<vmem>>, vector<1x128xf32>
    %c0_10 = arith.constant 0 : index
    %17 = arith.index_cast %1 : i32 to index
    %18 = vector.load %arg6[%c0_10, %17] : memref<1x128xf32, #tpu.memory_space<vmem>>, vector<1x128xf32>
    %19 = arith.mulf %18, %4 : vector<1x128xf32>
    %20 = arith.addf %16, %19 : vector<1x128xf32>
    %21 = vector.broadcast %20 : vector<1x128xf32> to vector<16x128xf32>
    %22 = arith.addf %14, %21 : vector<16x128xf32>
    %c0_11 = arith.constant 0 : index
    %c0_12 = arith.constant 0 : index
    %23 = vector.load %arg9[%c0_11, %c0_12] : memref<16x128xf32, #tpu.memory_space<vmem>>, vector<16x128xf32>
    tpu.vector_store %arg9[%c0_11, %c0_12], %22 {strides = array<i32>} : memref<16x128xf32, #tpu.memory_space<vmem>>, vector<16x128xf32>,
    return
  }
  func.func @transform_0(%arg0: i32, %arg1: i32) -> (i32, i32) {
    %c0_i32 = arith.constant 0 : i32
    %c0_i32_0 = arith.constant 0 : i32
    return %arg1, %c0_i32 : i32, i32
  }
  func.func @transform_1(%arg0: i32, %arg1: i32) -> (i32, i32) {
    %c0_i32 = arith.constant 0 : i32
    %c0_i32_0 = arith.constant 0 : i32
    return %arg0, %c0_i32 : i32, i32
  }
  func.func @transform_2(%arg0: i32, %arg1: i32) -> (i32, i32) {
    %c0_i32 = arith.constant 0 : i32
    %c0_i32_0 = arith.constant 0 : i32
    return %arg0, %c0_i32 : i32, i32
  }
  func.func @transform_3(%arg0: i32, %arg1: i32) -> (i32, i32) {
    %c0_i32 = arith.constant 0 : i32
    %c0_i32_0 = arith.constant 0 : i32
    %c0_i32_1 = arith.constant 0 : i32
    return %c0_i32, %c0_i32_0 : i32, i32
  }
  func.func @transform_4(%arg0: i32, %arg1: i32) -> (i32, i32) {
    %c0_i32 = arith.constant 0 : i32
    %c0_i32_0 = arith.constant 0 : i32
    %c0_i32_1 = arith.constant 0 : i32
    return %c0_i32, %c0_i32_0 : i32, i32
  }
  func.func @transform_5(%arg0: i32, %arg1: i32) -> (i32, i32) {
    %c0_i32 = arith.constant 0 : i32
    %c0_i32_0 = arith.constant 0 : i32
    %c0_i32_1 = arith.constant 0 : i32
    return %c0_i32, %c0_i32_0 : i32, i32
  }
  func.func @transform_6(%arg0: i32, %arg1: i32) -> (i32, i32) {
    %c0_i32 = arith.constant 0 : i32
    %c0_i32_0 = arith.constant 0 : i32
    %c0_i32_1 = arith.constant 0 : i32
    return %c0_i32, %c0_i32_0 : i32, i32
  }
  func.func @transform_7(%arg0: i32, %arg1: i32) -> (i32, i32) {
    %c0_i32 = arith.constant 0 : i32
    return %arg1, %arg0 : i32, i32
  }
}

</mosaic_0001>

<llo_original>
// kernel: noisy_linear.1
$region0: #{noisy_linear.1}
  #allocation0 [shape = 'u32[]', space=smem, size = 0x4, offset = 0x4, fixed_abs, tag = 'smem constant byte address 0x4 - core index']
  #allocation1 [shape = 'u32[144,128]{1,0:T(1,128)}', space=vmem, size = 0x12000, scoped, tag = 'internal scratch']
  %s0 = inlined_call_operand.vmem [shape: bf16[16,128], index: 0, kind: input, shape index: {}]
  %s1 = inlined_call_operand.vmem [shape: bf16[128,128], index: 1, kind: input, shape index: {}]
  %s2 = inlined_call_operand.vmem [shape: bf16[128,128], index: 2, kind: input, shape index: {}]
  %s3 = inlined_call_operand.vmem [shape: f32[1,128], index: 3, kind: input, shape index: {}]
  %s4 = inlined_call_operand.vmem [shape: f32[1,128], index: 4, kind: input, shape index: {}]
  %s5 = inlined_call_operand.vmem [shape: bf16[1,128], index: 5, kind: input, shape index: {}]
  %s6 = inlined_call_operand.vmem [shape: f32[1,128], index: 6, kind: input, shape index: {}]
  %s7 = inlined_call_operand.vmem [shape: f32[16,128], index: 7, kind: output, shape index: {}]
  %s8 = sld [smem:[#allocation0]]
  $region38: #{noisy_linear.1} parent=0
    _
  %s10 = ssub.s32 1, %s8
  %s11 = scalar_select 0, %s10, %s8
  // Predicated region
  $region2: #{noisy_linear.1} parent=0 // pred_check
    _
  $region3: #{noisy_linear.1} parent=0 // pred_check_branch
    %13 = sbr.rel (0) target = $region5
  $region4: #{noisy_linear.1} parent=0 // pred_region
    _
  $region5: #{noisy_linear.1} parent=0 // pred_fallthru
    _
  // Predicated region
  $region6: #{noisy_linear.1} parent=0 // pred_check
    _
  $region7: #{noisy_linear.1} parent=0 // pred_check_branch
    %15 = sbr.rel (0) target = $region9
  $region8: #{noisy_linear.1} parent=0 // pred_region
    _
  $region9: #{noisy_linear.1} parent=0 // pred_fallthru
    _
  // Predicated region
  $region10: #{noisy_linear.1} parent=0 // pred_check
    _
  $region11: #{noisy_linear.1} parent=0 // pred_check_branch
    %17 = sbr.rel (0) target = $region13
  $region12: #{noisy_linear.1} parent=0 // pred_region
    _
  $region13: #{noisy_linear.1} parent=0 // pred_fallthru
    _
  // Predicated region
  $region14: #{noisy_linear.1} parent=0 // pred_check
    _
  $region15: #{noisy_linear.1} parent=0 // pred_check_branch
    %19 = sbr.rel (0) target = $region17
  $region16: #{noisy_linear.1} parent=0 // pred_region
    _
  $region17: #{noisy_linear.1} parent=0 // pred_fallthru
    _
  // Predicated region
  $region18: #{noisy_linear.1} parent=0 // pred_check
    _
  $region19: #{noisy_linear.1} parent=0 // pred_check_branch
    %21 = sbr.rel (0) target = $region21
  $region20: #{noisy_linear.1} parent=0 // pred_region
    _
  $region21: #{noisy_linear.1} parent=0 // pred_fallthru
    _
  // Predicated region
  $region22: #{noisy_linear.1} parent=0 // pred_check
    _
  $region23: #{noisy_linear.1} parent=0 // pred_check_branch
    %23 = sbr.rel (0) target = $region25
  $region24: #{noisy_linear.1} parent=0 // pred_region
    _
  $region25: #{noisy_linear.1} parent=0 // pred_fallthru
    _
  // Predicated region
  $region26: #{noisy_linear.1} parent=0 // pred_check
    _
  $region27: #{noisy_linear.1} parent=0 // pred_check_branch
    %25 = sbr.rel (0) target = $region29
  $region28: #{noisy_linear.1} parent=0 // pred_region
    _
  $region29: #{noisy_linear.1} parent=0 // pred_fallthru
    _
  %s27 = smul.u32 0, 128
  %v28 = vld [vmem:[%s0] sm:$0xf]
  %v29 = vld [vmem:[%s0 + $0x4] sm:$0xf]
  %s30 = sshra.s32 %s27, 7
  %s31 = sand.u32 %s27, 127
  %s32 = scalar_lea.vmem %s6, %s30
  %v33 = vld [vmem:[%s32] sm:$0x1]
  %v34 = vld [vmem:[%s1] sm:$0xf]
  %v35 = vld [vmem:[%s1 + $0x4] sm:$0xf]
  %v36 = vld [vmem:[%s1 + $0x8] sm:$0xf]
  %v37 = vld [vmem:[%s1 + $0xc] sm:$0xf]
  %v38 = vld [vmem:[%s1 + $0x10] sm:$0xf]
  %v39 = vld [vmem:[%s1 + $0x14] sm:$0xf]
  %v40 = vld [vmem:[%s1 + $0x18] sm:$0xf]
  %v41 = vld [vmem:[%s1 + $0x1c] sm:$0xf]
  %v42 = vld [vmem:[%s1 + $0x20] sm:$0xf]
  %v43 = vld [vmem:[%s1 + $0x24] sm:$0xf]
  %v44 = vld [vmem:[%s1 + $0x28] sm:$0xf]
  %v45 = vld [vmem:[%s1 + $0x2c] sm:$0xf]
  %v46 = vld [vmem:[%s1 + $0x30] sm:$0xf]
  %v47 = vld [vmem:[%s1 + $0x34] sm:$0xf]
  %v48 = vld [vmem:[%s1 + $0x38] sm:$0xf]
  %v49 = vld [vmem:[%s1 + $0x3c] sm:$0xf]
  %v50 = vld [vmem:[%s5] sm:$0x1]
  %v52 = vpack.i.b16 %v50, %v50
  %v54 = vlaneseq
  %v55 = vshrl.u32 %v54, 7
  %v56 = vsub.s32 0, %v55
  %v57 = vrot.slane %v52, %v56
  %v59 = vunpack.c.l.b16 %v57
  %v60 = vpack.c.b16 %v59, %v59
  %v62 = vmul.bf16 %v28, %v60
  %v63 = vmul.bf16 %v29, %v60
  %v64 = vld [vmem:[%s2] sm:$0xf]
  %v65 = vld [vmem:[%s2 + $0x4] sm:$0xf]
  %v66 = vld [vmem:[%s2 + $0x8] sm:$0xf]
  %v67 = vld [vmem:[%s2 + $0xc] sm:$0xf]
  %v68 = vld [vmem:[%s2 + $0x10] sm:$0xf]
  %v69 = vld [vmem:[%s2 + $0x14] sm:$0xf]
  %v70 = vld [vmem:[%s2 + $0x18] sm:$0xf]
  %v71 = vld [vmem:[%s2 + $0x1c] sm:$0xf]
  %v72 = vld [vmem:[%s2 + $0x20] sm:$0xf]
  %v73 = vld [vmem:[%s2 + $0x24] sm:$0xf]
  %v74 = vld [vmem:[%s2 + $0x28] sm:$0xf]
  %v75 = vld [vmem:[%s2 + $0x2c] sm:$0xf]
  %v76 = vld [vmem:[%s2 + $0x30] sm:$0xf]
  %v77 = vld [vmem:[%s2 + $0x34] sm:$0xf]
  %v78 = vld [vmem:[%s2 + $0x38] sm:$0xf]
  %v79 = vld [vmem:[%s2 + $0x3c] sm:$0xf]
  %v82 = vunpack.c.l.b16 %v62
  %v83 = vunpack.c.l.b16 %v63
  %v84 = vpack.c.b16 %v83, %v82
  %v102 = vunpack.c.l.b16 %v64
  %v103 = vunpack.c.l.b16 %v65
  %v104 = vunpack.c.l.b16 %v66
  %v105 = vunpack.c.l.b16 %v67
  %v106 = vunpack.c.l.b16 %v68
  %v107 = vunpack.c.l.b16 %v69
  %v108 = vunpack.c.l.b16 %v70
  %v109 = vunpack.c.l.b16 %v71
  %v110 = vunpack.c.l.b16 %v72
  %v111 = vunpack.c.l.b16 %v73
  %v112 = vunpack.c.l.b16 %v74
  %v113 = vunpack.c.l.b16 %v75
  %v114 = vunpack.c.l.b16 %v76
  %v115 = vunpack.c.l.b16 %v77
  %v116 = vunpack.c.l.b16 %v78
  %v117 = vunpack.c.l.b16 %v79
  %v118 = vpack.c.b16 %v103, %v102
  %v119 = vpack.c.b16 %v105, %v104
  %v120 = vpack.c.b16 %v107, %v106
  %v121 = vpack.c.b16 %v109, %v108
  %v122 = vpack.c.b16 %v111, %v110
  %v123 = vpack.c.b16 %v113, %v112
  %v124 = vpack.c.b16 %v115, %v114
  %v125 = vpack.c.b16 %v117, %v116
  %134 = vmatprep.subr.bf16.mxu0 0
  %135 = vmatpush1.bf16.xpose.msra.mxu0 %v125
  %136 = vmatprep.subr.bf16.mxu0 0
  %137 = vmatpush1.bf16.xpose.msra.mxu0 %v124
  %138 = vmatprep.subr.bf16.mxu0 0
  %139 = vmatpush1.bf16.xpose.msra.mxu0 %v123
  %140 = vmatprep.subr.bf16.mxu0 0
  %141 = vmatpush1.bf16.xpose.msra.mxu0 %v122
  %142 = vmatprep.subr.bf16.mxu0 0
  %143 = vmatpush1.bf16.xpose.msra.mxu0 %v121
  %144 = vmatprep.subr.bf16.mxu0 0
  %145 = vmatpush1.bf16.xpose.msra.mxu0 %v120
  %146 = vmatprep.subr.bf16.mxu0 0
  %147 = vmatpush1.bf16.xpose.msra.mxu0 %v119
  %148 = vmatprep.subr.bf16.mxu0 0
  %149 = vmatpush1.bf16.xpose.msra.mxu0 %v118
  %150 = vmatprep.subr.bf16.mxu0 0
  %151 = vmatpush2.bf16.xpose.msra.mxu0 0
  %152 = vmatprep.subr.bf16.mxu0 0
  %153 = vmatpush2.bf16.xpose.msra.mxu0 0
  %154 = vmatprep.subr.bf16.mxu0 0
  %155 = vmatpush2.bf16.xpose.msra.mxu0 0
  %156 = vmatprep.subr.bf16.mxu0 0
  %157 = vmatpush2.bf16.xpose.msra.mxu0 0
  %158 = vmatprep.subr.bf16.mxu0 0
  %159 = vmatpush2.bf16.xpose.msra.mxu0 0
  %160 = vmatprep.subr.bf16.mxu0 0
  %161 = vmatpush2.bf16.xpose.msra.mxu0 0
  %162 = vmatprep.subr.bf16.mxu0 0
  %163 = vmatpush2.bf16.xpose.msra.mxu0 0
  %164 = vmatprep.subr.bf16.mxu0 0
  %165 = vmatpush2.bf16.xpose.msra.mxu0 0
  %166 = vmatprep.mubr.bf16.mxu0 0
  %167 = vmatmul.mubr.bf16.gmra.mxu0 %v84
  %v168 = vpop.f32.mrf.mxu0
  %v169 = vadd.f32 0.0, %v168
  %v170 = vpop.f32.mrf.mxu0
  %v171 = vpop.f32.mrf.mxu0
  %v172 = vadd.f32 0.0, %v171
  %v173 = vpop.f32.mrf.mxu0
  %174 = vdwg.mxu0
  %v176 = vlaneseq
  %v177 = vshrl.u32 %v176, 7
  %v178 = vsub.s32 0, %v177
  %v179 = vrot.slane %v33, %v178
  %v181 = vmul.f32 %v169, %v179
  %v182 = vmul.f32 %v172, %v179
  %v185 = vunpack.c.l.b16 %v28
  %v186 = vunpack.c.l.b16 %v29
  %v187 = vpack.c.b16 %v186, %v185
  %v205 = vunpack.c.l.b16 %v34
  %v206 = vunpack.c.l.b16 %v35
  %v207 = vunpack.c.l.b16 %v36
  %v208 = vunpack.c.l.b16 %v37
  %v209 = vunpack.c.l.b16 %v38
  %v210 = vunpack.c.l.b16 %v39
  %v211 = vunpack.c.l.b16 %v40
  %v212 = vunpack.c.l.b16 %v41
  %v213 = vunpack.c.l.b16 %v42
  %v214 = vunpack.c.l.b16 %v43
  %v215 = vunpack.c.l.b16 %v44
  %v216 = vunpack.c.l.b16 %v45
  %v217 = vunpack.c.l.b16 %v46
  %v218 = vunpack.c.l.b16 %v47
  %v219 = vunpack.c.l.b16 %v48
  %v220 = vunpack.c.l.b16 %v49
  %v221 = vpack.c.b16 %v206, %v205
  %v222 = vpack.c.b16 %v208, %v207
  %v223 = vpack.c.b16 %v210, %v209
  %v224 = vpack.c.b16 %v212, %v211
  %v225 = vpack.c.b16 %v214, %v213
  %v226 = vpack.c.b16 %v216, %v215
  %v227 = vpack.c.b16 %v218, %v217
  %v228 = vpack.c.b16 %v220, %v219
  %237 = vmatprep.subr.bf16.mxu0 0
  %238 = vmatpush1.bf16.xpose.msra.mxu0 %v228
  %239 = vmatprep.subr.bf16.mxu0 0
  %240 = vmatpush1.bf16.xpose.msra.mxu0 %v227
  %241 = vmatprep.subr.bf16.mxu0 0
  %242 = vmatpush1.bf16.xpose.msra.mxu0 %v226
  %243 = vmatprep.subr.bf16.mxu0 0
  %244 = vmatpush1.bf16.xpose.msra.mxu0 %v225
  %245 = vmatprep.subr.bf16.mxu0 0
  %246 = vmatpush1.bf16.xpose.msra.mxu0 %v224
  %247 = vmatprep.subr.bf16.mxu0 0
  %248 = vmatpush1.bf16.xpose.msra.mxu0 %v223
  %249 = vmatprep.subr.bf16.mxu0 0
  %250 = vmatpush1.bf16.xpose.msra.mxu0 %v222
  %251 = vmatprep.subr.bf16.mxu0 0
  %252 = vmatpush1.bf16.xpose.msra.mxu0 %v221
  %253 = vmatprep.subr.bf16.mxu0 0
  %254 = vmatpush2.bf16.xpose.msra.mxu0 0
  %255 = vmatprep.subr.bf16.mxu0 0
  %256 = vmatpush2.bf16.xpose.msra.mxu0 0
  %257 = vmatprep.subr.bf16.mxu0 0
  %258 = vmatpush2.bf16.xpose.msra.mxu0 0
  %259 = vmatprep.subr.bf16.mxu0 0
  %260 = vmatpush2.bf16.xpose.msra.mxu0 0
  %261 = vmatprep.subr.bf16.mxu0 0
  %262 = vmatpush2.bf16.xpose.msra.mxu0 0
  %263 = vmatprep.subr.bf16.mxu0 0
  %264 = vmatpush2.bf16.xpose.msra.mxu0 0
  %265 = vmatprep.subr.bf16.mxu0 0
  %266 = vmatpush2.bf16.xpose.msra.mxu0 0
  %267 = vmatprep.subr.bf16.mxu0 0
  %268 = vmatpush2.bf16.xpose.msra.mxu0 0
  %269 = vmatprep.mubr.bf16.mxu0 0
  %270 = vmatmul.mubr.bf16.gmra.mxu0 %v187
  %v271 = vpop.f32.mrf.mxu0
  %v272 = vadd.f32 %v181, %v271
  %v273 = vpop.f32.mrf.mxu0
  %v274 = vpop.f32.mrf.mxu0
  %v275 = vadd.f32 %v182, %v274
  %v276 = vpop.f32.mrf.mxu0
  %277 = vdwg.mxu0
  %s278 = scalar_lea.vmem %s3, %s30
  %v279 = vld [vmem:[%s278] sm:$0x1]
  %s280 = scalar_lea.vmem %s4, %s30
  %v281 = vld [vmem:[%s280] sm:$0x1]
  %v282 = vmul.f32 %v281, %v33
  %v283 = vadd.f32 %v279, %v282
  %v285 = vlaneseq
  %v286 = vshrl.u32 %v285, 7
  %v287 = vsub.s32 0, %v286
  %v288 = vrot.slane %v283, %v287
  %v290 = vadd.f32 %v272, %v288
  %v291 = vadd.f32 %v275, %v288
  %292 = vst [vmem:[%s7] sm:$0xff] %v290
  %293 = vst [vmem:[%s7 + $0x8] sm:$0xff] %v291
  // Predicated region
  $region30: #{noisy_linear.1} parent=0 // pred_check
    _
  $region31: #{noisy_linear.1} parent=0 // pred_check_branch
    %295 = sbr.rel (0) target = $region33
  $region32: #{noisy_linear.1} parent=0 // pred_region
    _
  $region33: #{noisy_linear.1} parent=0 // pred_fallthru
    _
  // Predicated region
  $region34: #{noisy_linear.1} parent=0 // pred_check
    _
  $region35: #{noisy_linear.1} parent=0 // pred_check_branch
    %297 = sbr.rel (0) target = $region37
  $region36: #{noisy_linear.1} parent=0 // pred_region
    _
  $region37: #{noisy_linear.1} parent=0 // pred_fallthru
    _

</llo_original>
